<compile_context>
chip_gen: v7x
topology: tpu7x:2x2x1
jax: 0.10.0
libtpu: 0.0.40
codegen_flags: <defaults>
</compile_context>

<pallas_src>
import functools

import jax
import jax.numpy as jnp
from jax import lax
from jax.experimental import pallas as pl
from jax.experimental.pallas import tpu as pltpu


def lstm_block_kernel(x_ref, g_ref, wall_ref, wo_ref, o_ref, *, batch, seq):
    """x_ref is (S*B, D) in TIME-MAJOR row order (row = t*B + b)."""
    H = wo_ref.shape[0]

    xb = x_ref[...]                                              # (S*B, D)

    # --- RMSNorm (eps = 1e-5) ---
    ms = jnp.mean(xb * xb, axis=-1, keepdims=True)
    xn = xb * lax.rsqrt(ms + 1e-5) * g_ref[...]                  # (S*B, D)

    # --- single fused projection: columns = [w | wfi_f | wfi_i | wh_tilde] ---
    proj = jnp.dot(xn, wall_ref[...],
                   preferred_element_type=jnp.float32)           # (S*B, 4H)

    w0 = proj[:, 0 * H:1 * H]                                    # (S*B, H)
    f = jax.nn.sigmoid(proj[:, 1 * H:2 * H])
    i_gate = jax.nn.sigmoid(proj[:, 2 * H:3 * H])
    h_tilde = proj[:, 3 * H:4 * H]

    # --- gates (n_heads = 1) ---
    denom = pl.reciprocal(f + i_gate + 0.0001)                   # EUP, off VALU
    a = f * denom                                                # (S*B, H)
    b = h_tilde * i_gate * denom                                 # (S*B, H)

    # --- register-resident sequential scan: h_t = a_t * h_{t-1} + b_t ---
    # carry is (B, H): batch on sublanes, H on lanes; statically unrolled.
    h = jnp.zeros((batch, H), jnp.float32)
    hs = []
    for t in range(seq):                                         # seq is static
        rows = slice(t * batch, (t + 1) * batch)
        h = a[rows, :] * h + b[rows, :]
        hs.append(h)
    h_all = jnp.concatenate(hs, axis=0)                          # (S*B, H)

    # --- gate with SiLU(w0), output projection, residual ---
    gated = h_all * (w0 * jax.nn.sigmoid(w0))                    # h * silu(w0)
    out = jnp.dot(gated, wo_ref[...],
                  preferred_element_type=jnp.float32)            # (S*B, D)
    o_ref[...] = (xb + out).astype(o_ref.dtype)


@jax.jit
def lstm_block(x, gamma, ww, wfi, wh, wo):
    B, S, D = x.shape
    H = ww.shape[1]

    # Fused projection weight (D, 4H): [w | wfi | wh_tilde].
    w_all = jnp.concatenate([ww, wfi, wh], axis=1)

    # Time-major rows: each timestep is a contiguous (B, H) sublane slab.
    xt = jnp.transpose(x, (1, 0, 2)).reshape(S * B, D)

    kernel = functools.partial(lstm_block_kernel, batch=B, seq=S)

    out_t = pl.pallas_call(
        kernel,
        out_shape=jax.ShapeDtypeStruct((S * B, D), x.dtype),
        grid=(1,),
        in_specs=[
            pl.BlockSpec((S * B, D), lambda i: (0, 0)),   # x (time-major)
            pl.BlockSpec((1, D), lambda i: (0, 0)),       # rmsnorm weight
            pl.BlockSpec((D, 4 * H), lambda i: (0, 0)),   # fused w|wfi|wh
            pl.BlockSpec((H, D), lambda i: (0, 0)),       # wo
        ],
        out_specs=pl.BlockSpec((S * B, D), lambda i: (0, 0)),
        input_output_aliases={0: 0},                      # reuse xt's buffer
        compiler_params=pltpu.CompilerParams(
            dimension_semantics=("arbitrary",)),
    )(xt, gamma, w_all, wo)

    return jnp.transpose(out_t.reshape(S, B, D), (1, 0, 2))


def reference(x, gamma, ww, wfi, wh, wo):
    """Pure-JAX reference replicating the PyTorch forward semantics."""
    B, S, D = x.shape
    H = ww.shape[1]
    ms = jnp.mean(x * x, axis=-1, keepdims=True)
    xn = x * lax.rsqrt(ms + 1e-5) * gamma[0]
    w0 = xn @ ww
    fi = xn @ wfi
    h_tilde = xn @ wh
    f = jax.nn.sigmoid(fi[..., :H])
    i = jax.nn.sigmoid(fi[..., H:])
    denom = 1.0 / (f + i + 0.0001)
    a = f * denom
    b = h_tilde * i * denom

    def step(h_prev, ab):
        a_t, b_t = ab
        h_t = a_t * h_prev + b_t
        return h_t, h_t

    _, h = lax.scan(step, jnp.zeros((B, H), jnp.float32),
                    (jnp.swapaxes(a, 0, 1), jnp.swapaxes(b, 0, 1)))
    h = jnp.swapaxes(h, 0, 1)                                    # (B, S, H)
    gated = h * (w0 * jax.nn.sigmoid(w0))
    return x + gated @ wo


if __name__ == "__main__":
    # Module config: dim=64, n_heads=1, multiple_of=64, ffn_dim_multiplier=None,
    # conv_size=None -> hidden_dim = round_up(int(2 * (3*64) / 3), 64) = 128
    B, S, D, H = 2, 16, 64, 128

    key = jax.random.PRNGKey(0)
    kx, kw, kfi, kh, ko = jax.random.split(key, 5)

    in_std = D ** -0.5
    out_std = H ** -0.5
    x = jax.random.normal(kx, (B, S, D), jnp.float32)
    gamma = jnp.ones((1, D), jnp.float32)                        # RMSNorm weight
    ww = jax.random.normal(kw, (D, H), jnp.float32) * in_std
    wfi = jax.random.normal(kfi, (D, 2 * H), jnp.float32) * in_std
    wh = jax.random.normal(kh, (D, H), jnp.float32) * in_std
    wo = jax.random.normal(ko, (H, D), jnp.float32) * out_std

    y = lstm_block(x, gamma, ww, wfi, wh, wo)
    jax.block_until_ready(y)

    y_ref = reference(x, gamma, ww, wfi, wh, wo)
    assert y.shape == (B, S, D)
    assert jnp.allclose(y, y_ref, atol=1e-3, rtol=1e-3), "mismatch vs reference"

    print("KERNEL_OK")
</pallas_src>

<mosaic_0001>
module attributes {stable_mosaic.version = 11 : i64} {
  func.func @lstm_block_kernel(%arg0: i32, %arg1: memref<32x64xf32, #tpu.memory_space<vmem>>, %arg2: memref<1x64xf32, #tpu.memory_space<vmem>>, %arg3: memref<64x512xf32, #tpu.memory_space<vmem>>, %arg4: memref<128x64xf32, #tpu.memory_space<vmem>>, %arg5: memref<32x64xf32, #tpu.memory_space<vmem>>) attributes {dimension_semantics = [#tpu.dimension_semantics<arbitrary>], iteration_bounds = array<i64: 1>, scalar_prefetch = 0 : i64, scratch_operands = 0 : i64, tpu.core_type = #tpu.core_type<tc>, window_params = [{pipeline_mode = #tpu.pipeline_mode<synchronous>, transform_indices = @transform_0, window_bounds = array<i64: 32, 64>}, {pipeline_mode = #tpu.pipeline_mode<synchronous>, transform_indices = @transform_1, window_bounds = array<i64: 1, 64>}, {pipeline_mode = #tpu.pipeline_mode<synchronous>, transform_indices = @transform_2, window_bounds = array<i64: 64, 512>}, {pipeline_mode = #tpu.pipeline_mode<synchronous>, transform_indices = @transform_3, window_bounds = array<i64: 128, 64>}, {pipeline_mode = #tpu.pipeline_mode<synchronous>, transform_indices = @transform_4, window_bounds = array<i64: 32, 64>}]} {
    %c0 = arith.constant 0 : index
    %c0_0 = arith.constant 0 : index
    %0 = vector.load %arg1[%c0, %c0_0] : memref<32x64xf32, #tpu.memory_space<vmem>>, vector<32x64xf32>
    %1 = arith.mulf %0, %0 : vector<32x64xf32>
    %cst = arith.constant dense<0.000000e+00> : vector<32xf32>
    %2 = vector.multi_reduction <add>, %1, %cst [1] : vector<32x64xf32> to vector<32xf32>
    %3 = vector.shape_cast %2 : vector<32xf32> to vector<32x1xf32>
    %cst_1 = arith.constant 6.400000e+01 : f32
    %4 = vector.broadcast %cst_1 : f32 to vector<32x1xf32>
    %5 = arith.divf %3, %4 : vector<32x1xf32>
    %cst_2 = arith.constant 9.99999974E-6 : f32
    %6 = vector.broadcast %cst_2 : f32 to vector<32x1xf32>
    %7 = arith.addf %5, %6 : vector<32x1xf32>
    %8 = math.rsqrt %7 : vector<32x1xf32>
    %9 = vector.broadcast %8 : vector<32x1xf32> to vector<32x64xf32>
    %10 = arith.mulf %0, %9 : vector<32x64xf32>
    %c0_3 = arith.constant 0 : index
    %c0_4 = arith.constant 0 : index
    %11 = vector.load %arg2[%c0_3, %c0_4] : memref<1x64xf32, #tpu.memory_space<vmem>>, vector<1x64xf32>
    %12 = vector.broadcast %11 : vector<1x64xf32> to vector<32x64xf32>
    %13 = arith.mulf %10, %12 : vector<32x64xf32>
    %c0_5 = arith.constant 0 : index
    %c0_6 = arith.constant 0 : index
    %14 = vector.load %arg3[%c0_5, %c0_6] : memref<64x512xf32, #tpu.memory_space<vmem>>, vector<64x512xf32>
    %cst_7 = arith.constant dense<0.000000e+00> : vector<32x512xf32>
    %15 = tpu.matmul %13, %14, %cst_7 {dimension_numbers = #tpu.dot_dimension_numbers<[1], [0], [0], [1], [0, 0, 1, 1], [], []>} : vector<32x64xf32>, vector<64x512xf32>, vector<32x512xf32> -> vector<32x512xf32>
    %16 = vector.extract_strided_slice %15 {offsets = [0, 0], sizes = [32, 128], strides = [1, 1]} : vector<32x512xf32> to vector<32x128xf32>
    %17 = vector.extract_strided_slice %15 {offsets = [0, 128], sizes = [32, 128], strides = [1, 1]} : vector<32x512xf32> to vector<32x128xf32>
    %18 = arith.negf %17 : vector<32x128xf32>
    %19 = math.exp %18 : vector<32x128xf32>
    %cst_8 = arith.constant 1.000000e+00 : f32
    %20 = vector.broadcast %cst_8 : f32 to vector<32x128xf32>
    %21 = arith.addf %20, %19 : vector<32x128xf32>
    %22 = arith.divf %20, %21 : vector<32x128xf32>
    %23 = vector.extract_strided_slice %15 {offsets = [0, 256], sizes = [32, 128], strides = [1, 1]} : vector<32x512xf32> to vector<32x128xf32>
    %24 = arith.negf %23 : vector<32x128xf32>
    %25 = math.exp %24 : vector<32x128xf32>
    %cst_9 = arith.constant 1.000000e+00 : f32
    %26 = vector.broadcast %cst_9 : f32 to vector<32x128xf32>
    %27 = arith.addf %26, %25 : vector<32x128xf32>
    %28 = arith.divf %26, %27 : vector<32x128xf32>
    %29 = vector.extract_strided_slice %15 {offsets = [0, 384], sizes = [32, 128], strides = [1, 1]} : vector<32x512xf32> to vector<32x128xf32>
    %30 = arith.addf %22, %28 : vector<32x128xf32>
    %cst_10 = arith.constant 9.99999974E-5 : f32
    %31 = vector.broadcast %cst_10 : f32 to vector<32x128xf32>
    %32 = arith.addf %30, %31 : vector<32x128xf32>
    %33 = tpu.reciprocal %32 : vector<32x128xf32> -> vector<32x128xf32>
    %34 = arith.mulf %22, %33 : vector<32x128xf32>
    %35 = arith.mulf %29, %28 : vector<32x128xf32>
    %36 = arith.mulf %35, %33 : vector<32x128xf32>
    %cst_11 = arith.constant 0.000000e+00 : f32
    %37 = vector.broadcast %cst_11 : f32 to vector<2x128xf32>
    %38 = vector.extract_strided_slice %34 {offsets = [0, 0], sizes = [2, 128], strides = [1, 1]} : vector<32x128xf32> to vector<2x128xf32>
    %39 = arith.mulf %38, %37 : vector<2x128xf32>
    %40 = vector.extract_strided_slice %36 {offsets = [0, 0], sizes = [2, 128], strides = [1, 1]} : vector<32x128xf32> to vector<2x128xf32>
    %41 = arith.addf %39, %40 : vector<2x128xf32>
    %42 = vector.extract_strided_slice %34 {offsets = [2, 0], sizes = [2, 128], strides = [1, 1]} : vector<32x128xf32> to vector<2x128xf32>
    %43 = arith.mulf %42, %41 : vector<2x128xf32>
    %44 = vector.extract_strided_slice %36 {offsets = [2, 0], sizes = [2, 128], strides = [1, 1]} : vector<32x128xf32> to vector<2x128xf32>
    %45 = arith.addf %43, %44 : vector<2x128xf32>
    %46 = vector.extract_strided_slice %34 {offsets = [4, 0], sizes = [2, 128], strides = [1, 1]} : vector<32x128xf32> to vector<2x128xf32>
    %47 = arith.mulf %46, %45 : vector<2x128xf32>
    %48 = vector.extract_strided_slice %36 {offsets = [4, 0], sizes = [2, 128], strides = [1, 1]} : vector<32x128xf32> to vector<2x128xf32>
    %49 = arith.addf %47, %48 : vector<2x128xf32>
    %50 = vector.extract_strided_slice %34 {offsets = [6, 0], sizes = [2, 128], strides = [1, 1]} : vector<32x128xf32> to vector<2x128xf32>
    %51 = arith.mulf %50, %49 : vector<2x128xf32>
    %52 = vector.extract_strided_slice %36 {offsets = [6, 0], sizes = [2, 128], strides = [1, 1]} : vector<32x128xf32> to vector<2x128xf32>
    %53 = arith.addf %51, %52 : vector<2x128xf32>
    %54 = vector.extract_strided_slice %34 {offsets = [8, 0], sizes = [2, 128], strides = [1, 1]} : vector<32x128xf32> to vector<2x128xf32>
    %55 = arith.mulf %54, %53 : vector<2x128xf32>
    %56 = vector.extract_strided_slice %36 {offsets = [8, 0], sizes = [2, 128], strides = [1, 1]} : vector<32x128xf32> to vector<2x128xf32>
    %57 = arith.addf %55, %56 : vector<2x128xf32>
    %58 = vector.extract_strided_slice %34 {offsets = [10, 0], sizes = [2, 128], strides = [1, 1]} : vector<32x128xf32> to vector<2x128xf32>
    %59 = arith.mulf %58, %57 : vector<2x128xf32>
    %60 = vector.extract_strided_slice %36 {offsets = [10, 0], sizes = [2, 128], strides = [1, 1]} : vector<32x128xf32> to vector<2x128xf32>
    %61 = arith.addf %59, %60 : vector<2x128xf32>
    %62 = vector.extract_strided_slice %34 {offsets = [12, 0], sizes = [2, 128], strides = [1, 1]} : vector<32x128xf32> to vector<2x128xf32>
    %63 = arith.mulf %62, %61 : vector<2x128xf32>
    %64 = vector.extract_strided_slice %36 {offsets = [12, 0], sizes = [2, 128], strides = [1, 1]} : vector<32x128xf32> to vector<2x128xf32>
    %65 = arith.addf %63, %64 : vector<2x128xf32>
    %66 = vector.extract_strided_slice %34 {offsets = [14, 0], sizes = [2, 128], strides = [1, 1]} : vector<32x128xf32> to vector<2x128xf32>
    %67 = arith.mulf %66, %65 : vector<2x128xf32>
    %68 = vector.extract_strided_slice %36 {offsets = [14, 0], sizes = [2, 128], strides = [1, 1]} : vector<32x128xf32> to vector<2x128xf32>
    %69 = arith.addf %67, %68 : vector<2x128xf32>
    %70 = vector.extract_strided_slice %34 {offsets = [16, 0], sizes = [2, 128], strides = [1, 1]} : vector<32x128xf32> to vector<2x128xf32>
    %71 = arith.mulf %70, %69 : vector<2x128xf32>
    %72 = vector.extract_strided_slice %36 {offsets = [16, 0], sizes = [2, 128], strides = [1, 1]} : vector<32x128xf32> to vector<2x128xf32>
    %73 = arith.addf %71, %72 : vector<2x128xf32>
    %74 = vector.extract_strided_slice %34 {offsets = [18, 0], sizes = [2, 128], strides = [1, 1]} : vector<32x128xf32> to vector<2x128xf32>
    %75 = arith.mulf %74, %73 : vector<2x128xf32>
    %76 = vector.extract_strided_slice %36 {offsets = [18, 0], sizes = [2, 128], strides = [1, 1]} : vector<32x128xf32> to vector<2x128xf32>
    %77 = arith.addf %75, %76 : vector<2x128xf32>
    %78 = vector.extract_strided_slice %34 {offsets = [20, 0], sizes = [2, 128], strides = [1, 1]} : vector<32x128xf32> to vector<2x128xf32>
    %79 = arith.mulf %78, %77 : vector<2x128xf32>
    %80 = vector.extract_strided_slice %36 {offsets = [20, 0], sizes = [2, 128], strides = [1, 1]} : vector<32x128xf32> to vector<2x128xf32>
    %81 = arith.addf %79, %80 : vector<2x128xf32>
    %82 = vector.extract_strided_slice %34 {offsets = [22, 0], sizes = [2, 128], strides = [1, 1]} : vector<32x128xf32> to vector<2x128xf32>
    %83 = arith.mulf %82, %81 : vector<2x128xf32>
    %84 = vector.extract_strided_slice %36 {offsets = [22, 0], sizes = [2, 128], strides = [1, 1]} : vector<32x128xf32> to vector<2x128xf32>
    %85 = arith.addf %83, %84 : vector<2x128xf32>
    %86 = vector.extract_strided_slice %34 {offsets = [24, 0], sizes = [2, 128], strides = [1, 1]} : vector<32x128xf32> to vector<2x128xf32>
    %87 = arith.mulf %86, %85 : vector<2x128xf32>
    %88 = vector.extract_strided_slice %36 {offsets = [24, 0], sizes = [2, 128], strides = [1, 1]} : vector<32x128xf32> to vector<2x128xf32>
    %89 = arith.addf %87, %88 : vector<2x128xf32>
    %90 = vector.extract_strided_slice %34 {offsets = [26, 0], sizes = [2, 128], strides = [1, 1]} : vector<32x128xf32> to vector<2x128xf32>
    %91 = arith.mulf %90, %89 : vector<2x128xf32>
    %92 = vector.extract_strided_slice %36 {offsets = [26, 0], sizes = [2, 128], strides = [1, 1]} : vector<32x128xf32> to vector<2x128xf32>
    %93 = arith.addf %91, %92 : vector<2x128xf32>
    %94 = vector.extract_strided_slice %34 {offsets = [28, 0], sizes = [2, 128], strides = [1, 1]} : vector<32x128xf32> to vector<2x128xf32>
    %95 = arith.mulf %94, %93 : vector<2x128xf32>
    %96 = vector.extract_strided_slice %36 {offsets = [28, 0], sizes = [2, 128], strides = [1, 1]} : vector<32x128xf32> to vector<2x128xf32>
    %97 = arith.addf %95, %96 : vector<2x128xf32>
    %98 = vector.extract_strided_slice %34 {offsets = [30, 0], sizes = [2, 128], strides = [1, 1]} : vector<32x128xf32> to vector<2x128xf32>
    %99 = arith.mulf %98, %97 : vector<2x128xf32>
    %100 = vector.extract_strided_slice %36 {offsets = [30, 0], sizes = [2, 128], strides = [1, 1]} : vector<32x128xf32> to vector<2x128xf32>
    %101 = arith.addf %99, %100 : vector<2x128xf32>
    %102 = tpu.concatenate %41, %45, %49, %53, %57, %61, %65, %69, %73, %77, %81, %85, %89, %93, %97, %101 in 0 : vector<2x128xf32>, vector<2x128xf32>, vector<2x128xf32>, vector<2x128xf32>, vector<2x128xf32>, vector<2x128xf32>, vector<2x128xf32>, vector<2x128xf32>, vector<2x128xf32>, vector<2x128xf32>, vector<2x128xf32>, vector<2x128xf32>, vector<2x128xf32>, vector<2x128xf32>, vector<2x128xf32>, vector<2x128xf32> -> vector<32x128xf32>
    %103 = arith.negf %16 : vector<32x128xf32>
    %104 = math.exp %103 : vector<32x128xf32>
    %cst_12 = arith.constant 1.000000e+00 : f32
    %105 = vector.broadcast %cst_12 : f32 to vector<32x128xf32>
    %106 = arith.addf %105, %104 : vector<32x128xf32>
    %107 = arith.divf %105, %106 : vector<32x128xf32>
    %108 = arith.mulf %16, %107 : vector<32x128xf32>
    %109 = arith.mulf %102, %108 : vector<32x128xf32>
    %c0_13 = arith.constant 0 : index
    %c0_14 = arith.constant 0 : index
    %110 = vector.load %arg4[%c0_13, %c0_14] : memref<128x64xf32, #tpu.memory_space<vmem>>, vector<128x64xf32>
    %cst_15 = arith.constant dense<0.000000e+00> : vector<32x64xf32>
    %111 = tpu.matmul %109, %110, %cst_15 {dimension_numbers = #tpu.dot_dimension_numbers<[1], [0], [0], [1], [0, 0, 1, 1], [], []>} : vector<32x128xf32>, vector<128x64xf32>, vector<32x64xf32> -> vector<32x64xf32>
    %112 = arith.addf %0, %111 : vector<32x64xf32>
    %c0_16 = arith.constant 0 : index
    %c0_17 = arith.constant 0 : index
    %113 = vector.load %arg5[%c0_16, %c0_17] : memref<32x64xf32, #tpu.memory_space<vmem>>, vector<32x64xf32>
    tpu.vector_store %arg5[%c0_16, %c0_17], %112 {strides = array<i32>} : memref<32x64xf32, #tpu.memory_space<vmem>>, vector<32x64xf32>,
    return
  }
  func.func @transform_0(%arg0: i32) -> (i32, i32) {
    %c0_i32 = arith.constant 0 : i32
    %c0_i32_0 = arith.constant 0 : i32
    %c0_i32_1 = arith.constant 0 : i32
    return %c0_i32, %c0_i32_0 : i32, i32
  }
  func.func @transform_1(%arg0: i32) -> (i32, i32) {
    %c0_i32 = arith.constant 0 : i32
    %c0_i32_0 = arith.constant 0 : i32
    %c0_i32_1 = arith.constant 0 : i32
    return %c0_i32, %c0_i32_0 : i32, i32
  }
  func.func @transform_2(%arg0: i32) -> (i32, i32) {
    %c0_i32 = arith.constant 0 : i32
    %c0_i32_0 = arith.constant 0 : i32
    %c0_i32_1 = arith.constant 0 : i32
    return %c0_i32, %c0_i32_0 : i32, i32
  }
  func.func @transform_3(%arg0: i32) -> (i32, i32) {
    %c0_i32 = arith.constant 0 : i32
    %c0_i32_0 = arith.constant 0 : i32
    %c0_i32_1 = arith.constant 0 : i32
    return %c0_i32, %c0_i32_0 : i32, i32
  }
  func.func @transform_4(%arg0: i32) -> (i32, i32) {
    %c0_i32 = arith.constant 0 : i32
    %c0_i32_0 = arith.constant 0 : i32
    %c0_i32_1 = arith.constant 0 : i32
    return %c0_i32, %c0_i32_0 : i32, i32
  }
}

</mosaic_0001>

<llo_original>
// kernel: lstm_block.1
$region0: #{lstm_block.1}
  #allocation0 [shape = 'u32[]', space=smem, size = 0x4, offset = 0x4, fixed_abs, tag = 'smem constant byte address 0x4 - core index']
  #allocation1 [shape = 'u32[144,128]{1,0:T(1,128)}', space=vmem, size = 0x12000, scoped, tag = 'internal scratch']
  %s0 = inlined_call_operand.vmem [shape: f32[32,64], index: 0, kind: input, shape index: {}, may-alias: {0,4}]
  %s1 = inlined_call_operand.vmem [shape: f32[1,64], index: 1, kind: input, shape index: {}]
  %s2 = inlined_call_operand.vmem [shape: f32[64,512], index: 2, kind: input, shape index: {}]
  %s3 = inlined_call_operand.vmem [shape: f32[128,64], index: 3, kind: input, shape index: {}]
  %s4 = inlined_call_operand.vmem [shape: f32[32,64], index: 4, kind: output, shape index: {}, may-alias: {0,4}]
  %s5 = sld [smem:[#allocation0]]
  $region26: #{lstm_block.1} parent=0
    _
  %s7 = ssub.s32 1, %s5
  %s8 = scalar_select 0, %s7, %s5
  // Predicated region
  $region2: #{lstm_block.1} parent=0 // pred_check
    _
  $region3: #{lstm_block.1} parent=0 // pred_check_branch
    %10 = sbr.rel (0) target = $region5
  $region4: #{lstm_block.1} parent=0 // pred_region
    _
  $region5: #{lstm_block.1} parent=0 // pred_fallthru
    _
  // Predicated region
  $region6: #{lstm_block.1} parent=0 // pred_check
    _
  $region7: #{lstm_block.1} parent=0 // pred_check_branch
    %12 = sbr.rel (0) target = $region9
  $region8: #{lstm_block.1} parent=0 // pred_region
    _
  $region9: #{lstm_block.1} parent=0 // pred_fallthru
    _
  // Predicated region
  $region10: #{lstm_block.1} parent=0 // pred_check
    _
  $region11: #{lstm_block.1} parent=0 // pred_check_branch
    %14 = sbr.rel (0) target = $region13
  $region12: #{lstm_block.1} parent=0 // pred_region
    _
  $region13: #{lstm_block.1} parent=0 // pred_fallthru
    _
  // Predicated region
  $region14: #{lstm_block.1} parent=0 // pred_check
    _
  $region15: #{lstm_block.1} parent=0 // pred_check_branch
    %16 = sbr.rel (0) target = $region17
  $region16: #{lstm_block.1} parent=0 // pred_region
    _
  $region17: #{lstm_block.1} parent=0 // pred_fallthru
    _
  %v17 = vld [vmem:[%s0] sm:$0xff]
  %v18 = vld [vmem:[%s0 + $0x8] sm:$0xff]
  %v19 = vld [vmem:[%s0 + $0x10] sm:$0xff]
  %v20 = vld [vmem:[%s0 + $0x18] sm:$0xff]
  %v21 = vmul.f32 %v17, %v17
  %v22 = vmul.f32 %v18, %v18
  %v23 = vmul.f32 %v19, %v19
  %v24 = vmul.f32 %v20, %v20
  %vm25 = vcmask 523264
  %v26 = vsel %vm25, %v21, 0.0
  %27 = vadd.xlane.f32.xlu0 %v26
  %v28 = vpop.xlane.xlu0 %27
  %v29 = vsel %vm25, %v22, 0.0
  %30 = vadd.xlane.f32.xlu0 %v29
  %v31 = vpop.xlane.xlu0 %30
  %v32 = vsel %vm25, %v23, 0.0
  %33 = vadd.xlane.f32.xlu0 %v32
  %v34 = vpop.xlane.xlu0 %33
  %v35 = vsel %vm25, %v24, 0.0
  %36 = vadd.xlane.f32.xlu0 %v35
  %v37 = vpop.xlane.xlu0 %36
  %v38 = vrcp.pop 64.0
  %v39 = vmul.f32 %v28, %v38
  %v40 = vmul.f32 %v31, %v38
  %v41 = vmul.f32 %v34, %v38
  %v42 = vmul.f32 %v37, %v38
  %v43 = vadd.f32 %v39, 1e-05
  %v44 = vadd.f32 %v40, 1e-05
  %v45 = vadd.f32 %v41, 1e-05
  %v46 = vadd.f32 %v42, 1e-05
  %v47 = vrsqrt.pop %v43
  %v48 = vrsqrt.pop %v44
  %v49 = vrsqrt.pop %v45
  %v50 = vrsqrt.pop %v46
  %v51 = vmul.f32 %v17, %v47
  %v52 = vmul.f32 %v18, %v48
  %v53 = vmul.f32 %v19, %v49
  %v54 = vmul.f32 %v20, %v50
  %v55 = vld [vmem:[%s1] sm:$0x1]
  %v57 = vlaneseq
  %v58 = vshrl.u32 %v57, 7
  %v59 = vsub.s32 0, %v58
  %v60 = vrot.slane %v55, %v59
  %v62 = vmul.f32 %v51, %v60
  %v63 = vmul.f32 %v52, %v60
  %v64 = vmul.f32 %v53, %v60
  %v65 = vmul.f32 %v54, %v60
  %v66 = vld [vmem:[%s2] sm:$0xff]
  %v67 = vld [vmem:[%s2 + $0x8] sm:$0xff]
  %v68 = vld [vmem:[%s2 + $0x10] sm:$0xff]
  %v69 = vld [vmem:[%s2 + $0x18] sm:$0xff]
  %v70 = vld [vmem:[%s2 + $0x20] sm:$0xff]
  %v71 = vld [vmem:[%s2 + $0x28] sm:$0xff]
  %v72 = vld [vmem:[%s2 + $0x30] sm:$0xff]
  %v73 = vld [vmem:[%s2 + $0x38] sm:$0xff]
  %v74 = vld [vmem:[%s2 + $0x40] sm:$0xff]
  %v75 = vld [vmem:[%s2 + $0x48] sm:$0xff]
  %v76 = vld [vmem:[%s2 + $0x50] sm:$0xff]
  %v77 = vld [vmem:[%s2 + $0x58] sm:$0xff]
  %v78 = vld [vmem:[%s2 + $0x60] sm:$0xff]
  %v79 = vld [vmem:[%s2 + $0x68] sm:$0xff]
  %v80 = vld [vmem:[%s2 + $0x70] sm:$0xff]
  %v81 = vld [vmem:[%s2 + $0x78] sm:$0xff]
  %v82 = vld [vmem:[%s2 + $0x80] sm:$0xff]
  %v83 = vld [vmem:[%s2 + $0x88] sm:$0xff]
  %v84 = vld [vmem:[%s2 + $0x90] sm:$0xff]
  %v85 = vld [vmem:[%s2 + $0x98] sm:$0xff]
  %v86 = vld [vmem:[%s2 + $0xa0] sm:$0xff]
  %v87 = vld [vmem:[%s2 + $0xa8] sm:$0xff]
  %v88 = vld [vmem:[%s2 + $0xb0] sm:$0xff]
  %v89 = vld [vmem:[%s2 + $0xb8] sm:$0xff]
  %v90 = vld [vmem:[%s2 + $0xc0] sm:$0xff]
  %v91 = vld [vmem:[%s2 + $0xc8] sm:$0xff]
  %v92 = vld [vmem:[%s2 + $0xd0] sm:$0xff]
  %v93 = vld [vmem:[%s2 + $0xd8] sm:$0xff]
  %v94 = vld [vmem:[%s2 + $0xe0] sm:$0xff]
  %v95 = vld [vmem:[%s2 + $0xe8] sm:$0xff]
  %v96 = vld [vmem:[%s2 + $0xf0] sm:$0xff]
  %v97 = vld [vmem:[%s2 + $0xf8] sm:$0xff]
  %v99 = vsel %vm25, %v62, 0
  %v102 = vsel %vm25, %v63, 0
  %v105 = vsel %vm25, %v64, 0
  %v108 = vsel %vm25, %v65, 0
  %110 = vmatprep.subr.mxu0 %v67
  %111 = vmatpush1.msra.mxu0 %v66
  %112 = vmatprep.subr.mxu0 %v71
  %113 = vmatpush1.msra.mxu0 %v70
  %114 = vmatprep.subr.mxu0 %v75
  %115 = vmatpush1.msra.mxu0 %v74
  %116 = vmatprep.subr.mxu0 %v79
  %117 = vmatpush1.msra.mxu0 %v78
  %118 = vmatprep.subr.mxu0 %v83
  %119 = vmatpush1.msra.mxu0 %v82
  %120 = vmatprep.subr.mxu0 %v87
  %121 = vmatpush1.msra.mxu0 %v86
  %122 = vmatprep.subr.mxu0 %v91
  %123 = vmatpush1.msra.mxu0 %v90
  %124 = vmatprep.subr.mxu0 %v95
  %125 = vmatpush1.msra.mxu0 %v94
  %126 = vmatprep.subr.mxu0 0.0
  %127 = vmatpush1.msra.mxu0 0.0
  %128 = vmatprep.subr.mxu0 0.0
  %129 = vmatpush1.msra.mxu0 0.0
  %130 = vmatprep.subr.mxu0 0.0
  %131 = vmatpush1.msra.mxu0 0.0
  %132 = vmatprep.subr.mxu0 0.0
  %133 = vmatpush1.msra.mxu0 0.0
  %134 = vmatprep.subr.mxu0 0.0
  %135 = vmatpush1.msra.mxu0 0.0
  %136 = vmatprep.subr.mxu0 0.0
  %137 = vmatpush1.msra.mxu0 0.0
  %138 = vmatprep.subr.mxu0 0.0
  %139 = vmatpush1.msra.mxu0 0.0
  %140 = vmatprep.subr.mxu0 0.0
  %141 = vmatpush1.msra.mxu0 0.0
  %142 = vmatprep.subr.mxu0 0.0
  %143 = vmatpush1.msra.mxu0 0.0
  %144 = vmatprep.subr.mxu0 0.0
  %145 = vmatpush1.msra.mxu0 0.0
  %146 = vmatprep.subr.mxu0 0.0
  %147 = vmatpush1.msra.mxu0 0.0
  %148 = vmatprep.subr.mxu0 0.0
  %149 = vmatpush1.msra.mxu0 0.0
  %150 = vmatprep.subr.mxu0 0.0
  %151 = vmatpush1.msra.mxu0 0.0
  %152 = vmatprep.subr.mxu0 0.0
  %153 = vmatpush1.msra.mxu0 0.0
  %154 = vmatprep.subr.mxu0 0.0
  %155 = vmatpush1.msra.mxu0 0.0
  %156 = vmatprep.subr.mxu0 0.0
  %157 = vmatpush1.msra.mxu0 0.0
  %158 = vmatprep.subr.mxu0 0.0
  %159 = vmatpush1.msra.mxu0 0.0
  %160 = vmatprep.subr.mxu0 0.0
  %161 = vmatpush1.msra.mxu0 0.0
  %162 = vmatprep.subr.mxu0 0.0
  %163 = vmatpush1.msra.mxu0 0.0
  %164 = vmatprep.subr.mxu0 0.0
  %165 = vmatpush1.msra.mxu0 0.0
  %166 = vmatprep.subr.mxu0 0.0
  %167 = vmatpush1.msra.mxu0 0.0
  %168 = vmatprep.subr.mxu0 0.0
  %169 = vmatpush1.msra.mxu0 0.0
  %170 = vmatprep.subr.mxu0 0.0
  %171 = vmatpush1.msra.mxu0 0.0
  %172 = vmatprep.subr.mxu0 0.0
  %173 = vmatpush1.msra.mxu0 0.0
  %174 = vmatprep.mubr.f32.mxu0 0.0
  %175 = vmatmul.mubr.f32.gmra.mrb[0].mxu0 %v99
  %v176 = vpop.f32.mrb[0].mxu0
  %v177 = vadd.f32 0.0, %v176
  %v178 = vpop.f32.mrb[0].mxu0
  %v179 = vadd.f32 0.0, %v178
  %180 = vmatprep.mubr.f32.mxu0 0.0
  %181 = vmatmul.mubr.f32.gmra.mrb[0].mxu0 %v102
  %v182 = vpop.f32.mrb[0].mxu0
  %v183 = vadd.f32 0.0, %v182
  %v184 = vpop.f32.mrb[0].mxu0
  %v185 = vadd.f32 0.0, %v184
  %186 = vmatprep.mubr.f32.mxu0 0.0
  %187 = vmatmul.mubr.f32.gmra.mrb[0].mxu0 %v105
  %v188 = vpop.f32.mrb[0].mxu0
  %v189 = vadd.f32 0.0, %v188
  %v190 = vpop.f32.mrb[0].mxu0
  %v191 = vadd.f32 0.0, %v190
  %192 = vmatprep.mubr.f32.mxu0 0.0
  %193 = vmatmul.mubr.f32.gmra.mrb[0].mxu0 %v108
  %v194 = vpop.f32.mrb[0].mxu0
  %v195 = vadd.f32 0.0, %v194
  %v196 = vpop.f32.mrb[0].mxu0
  %v197 = vadd.f32 0.0, %v196
  %198 = vdwg.mxu0
  %199 = vmatprep.subr.mxu0 %v69
  %200 = vmatpush1.msra.mxu0 %v68
  %201 = vmatprep.subr.mxu0 %v73
  %202 = vmatpush1.msra.mxu0 %v72
  %203 = vmatprep.subr.mxu0 %v77
  %204 = vmatpush1.msra.mxu0 %v76
  %205 = vmatprep.subr.mxu0 %v81
  %206 = vmatpush1.msra.mxu0 %v80
  %207 = vmatprep.subr.mxu0 %v85
  %208 = vmatpush1.msra.mxu0 %v84
  %209 = vmatprep.subr.mxu0 %v89
  %210 = vmatpush1.msra.mxu0 %v88
  %211 = vmatprep.subr.mxu0 %v93
  %212 = vmatpush1.msra.mxu0 %v92
  %213 = vmatprep.subr.mxu0 %v97
  %214 = vmatpush1.msra.mxu0 %v96
  %215 = vmatprep.subr.mxu0 0.0
  %216 = vmatpush1.msra.mxu0 0.0
  %217 = vmatprep.subr.mxu0 0.0
  %218 = vmatpush1.msra.mxu0 0.0
  %219 = vmatprep.subr.mxu0 0.0
  %220 = vmatpush1.msra.mxu0 0.0
  %221 = vmatprep.subr.mxu0 0.0
  %222 = vmatpush1.msra.mxu0 0.0
  %223 = vmatprep.subr.mxu0 0.0
  %224 = vmatpush1.msra.mxu0 0.0
  %225 = vmatprep.subr.mxu0 0.0
  %226 = vmatpush1.msra.mxu0 0.0
  %227 = vmatprep.subr.mxu0 0.0
  %228 = vmatpush1.msra.mxu0 0.0
  %229 = vmatprep.subr.mxu0 0.0
  %230 = vmatpush1.msra.mxu0 0.0
  %231 = vmatprep.subr.mxu0 0.0
  %232 = vmatpush1.msra.mxu0 0.0
  %233 = vmatprep.subr.mxu0 0.0
  %234 = vmatpush1.msra.mxu0 0.0
  %235 = vmatprep.subr.mxu0 0.0
  %236 = vmatpush1.msra.mxu0 0.0
  %237 = vmatprep.subr.mxu0 0.0
  %238 = vmatpush1.msra.mxu0 0.0
  %239 = vmatprep.subr.mxu0 0.0
  %240 = vmatpush1.msra.mxu0 0.0
  %241 = vmatprep.subr.mxu0 0.0
  %242 = vmatpush1.msra.mxu0 0.0
  %243 = vmatprep.subr.mxu0 0.0
  %244 = vmatpush1.msra.mxu0 0.0
  %245 = vmatprep.subr.mxu0 0.0
  %246 = vmatpush1.msra.mxu0 0.0
  %247 = vmatprep.subr.mxu0 0.0
  %248 = vmatpush1.msra.mxu0 0.0
  %249 = vmatprep.subr.mxu0 0.0
  %250 = vmatpush1.msra.mxu0 0.0
  %251 = vmatprep.subr.mxu0 0.0
  %252 = vmatpush1.msra.mxu0 0.0
  %253 = vmatprep.subr.mxu0 0.0
  %254 = vmatpush1.msra.mxu0 0.0
  %255 = vmatprep.subr.mxu0 0.0
  %256 = vmatpush1.msra.mxu0 0.0
  %257 = vmatprep.subr.mxu0 0.0
  %258 = vmatpush1.msra.mxu0 0.0
  %259 = vmatprep.subr.mxu0 0.0
  %260 = vmatpush1.msra.mxu0 0.0
  %261 = vmatprep.subr.mxu0 0.0
  %262 = vmatpush1.msra.mxu0 0.0
  %263 = vmatprep.mubr.f32.mxu0 0.0
  %264 = vmatmul.mubr.f32.gmra.mrb[0].mxu0 %v99
  %v265 = vpop.f32.mrb[0].mxu0
  %v266 = vadd.f32 0.0, %v265
  %v267 = vpop.f32.mrb[0].mxu0
  %v268 = vadd.f32 0.0, %v267
  %269 = vmatprep.mubr.f32.mxu0 0.0
  %270 = vmatmul.mubr.f32.gmra.mrb[0].mxu0 %v102
  %v271 = vpop.f32.mrb[0].mxu0
  %v272 = vadd.f32 0.0, %v271
  %v273 = vpop.f32.mrb[0].mxu0
  %v274 = vadd.f32 0.0, %v273
  %275 = vmatprep.mubr.f32.mxu0 0.0
  %276 = vmatmul.mubr.f32.gmra.mrb[0].mxu0 %v105
  %v277 = vpop.f32.mrb[0].mxu0
  %v278 = vadd.f32 0.0, %v277
  %v279 = vpop.f32.mrb[0].mxu0
  %v280 = vadd.f32 0.0, %v279
  %281 = vmatprep.mubr.f32.mxu0 0.0
  %282 = vmatmul.mubr.f32.gmra.mrb[0].mxu0 %v108
  %v283 = vpop.f32.mrb[0].mxu0
  %v284 = vadd.f32 0.0, %v283
  %v285 = vpop.f32.mrb[0].mxu0
  %v286 = vadd.f32 0.0, %v285
  %287 = vdwg.mxu0
  %v288 = vxor.u32 %v179, 2147483648
  %v289 = vxor.u32 %v185, 2147483648
  %v290 = vxor.u32 %v191, 2147483648
  %v291 = vxor.u32 %v197, 2147483648
  %v292 = vmul.f32 %v288, 1.442695
  %v293 = vpow.pop %v292
  %v294 = vmul.f32 %v289, 1.442695
  %v295 = vpow.pop %v294
  %v296 = vmul.f32 %v290, 1.442695
  %v297 = vpow.pop %v296
  %v298 = vmul.f32 %v291, 1.442695
  %v299 = vpow.pop %v298
  %v300 = vadd.f32 %v293, 1.0
  %v301 = vadd.f32 %v295, 1.0
  %v302 = vadd.f32 %v297, 1.0
  %v303 = vadd.f32 %v299, 1.0
  %v304 = vrcp.pop %v300
  %v305 = vmul.f32 1.0, %v304
  %v306 = vrcp.pop %v301
  %v307 = vmul.f32 1.0, %v306
  %v308 = vrcp.pop %v302
  %v309 = vmul.f32 1.0, %v308
  %v310 = vrcp.pop %v303
  %v311 = vmul.f32 1.0, %v310
  %v312 = vxor.u32 %v266, 2147483648
  %v313 = vxor.u32 %v272, 2147483648
  %v314 = vxor.u32 %v278, 2147483648
  %v315 = vxor.u32 %v284, 2147483648
  %v316 = vmul.f32 %v312, 1.442695
  %v317 = vpow.pop %v316
  %v318 = vmul.f32 %v313, 1.442695
  %v319 = vpow.pop %v318
  %v320 = vmul.f32 %v314, 1.442695
  %v321 = vpow.pop %v320
  %v322 = vmul.f32 %v315, 1.442695
  %v323 = vpow.pop %v322
  %v324 = vadd.f32 %v317, 1.0
  %v325 = vadd.f32 %v319, 1.0
  %v326 = vadd.f32 %v321, 1.0
  %v327 = vadd.f32 %v323, 1.0
  %v328 = vrcp.pop %v324
  %v329 = vmul.f32 1.0, %v328
  %v330 = vrcp.pop %v325
  %v331 = vmul.f32 1.0, %v330
  %v332 = vrcp.pop %v326
  %v333 = vmul.f32 1.0, %v332
  %v334 = vrcp.pop %v327
  %v335 = vmul.f32 1.0, %v334
  %v336 = vadd.f32 %v305, %v329
  %v337 = vadd.f32 %v307, %v331
  %v338 = vadd.f32 %v309, %v333
  %v339 = vadd.f32 %v311, %v335
  %v340 = vadd.f32 %v336, 0.0001
  %v341 = vadd.f32 %v337, 0.0001
  %v342 = vadd.f32 %v338, 0.0001
  %v343 = vadd.f32 %v339, 0.0001
  %v344 = vrcp.pop %v340
  %v345 = vrcp.pop %v341
  %v346 = vrcp.pop %v342
  %v347 = vrcp.pop %v343
  %v348 = vmul.f32 %v305, %v344
  %v349 = vmul.f32 %v307, %v345
  %v350 = vmul.f32 %v309, %v346
  %v351 = vmul.f32 %v311, %v347
  %v352 = vmul.f32 %v268, %v329
  %v353 = vmul.f32 %v274, %v331
  %v354 = vmul.f32 %v280, %v333
  %v355 = vmul.f32 %v286, %v335
  %v356 = vmul.f32 %v352, %v344
  %v357 = vmul.f32 %v353, %v345
  %v358 = vmul.f32 %v354, %v346
  %v359 = vmul.f32 %v355, %v347
  %v360 = vmul.f32 %v348, 0.0
  %v361 = vadd.f32 %v360, %v356
  %v363 = vrot.slane %v361, 6
  %v365 = vmul.f32 %v348, %v363
  %v366 = vadd.f32 %v365, %v356
  %v368 = vrot.slane %v366, 6
  %v370 = vmul.f32 %v348, %v368
  %v371 = vadd.f32 %v370, %v356
  %v373 = vrot.slane %v371, 6
  %v375 = vmul.f32 %v348, %v373
  %v376 = vadd.f32 %v375, %v356
  %v378 = vrot.slane %v376, 6
  %v380 = vmul.f32 %v349, %v378
  %v381 = vadd.f32 %v380, %v357
  %v383 = vrot.slane %v381, 6
  %v385 = vmul.f32 %v349, %v383
  %v386 = vadd.f32 %v385, %v357
  %v388 = vrot.slane %v386, 6
  %v390 = vmul.f32 %v349, %v388
  %v391 = vadd.f32 %v390, %v357
  %v393 = vrot.slane %v391, 6
  %v395 = vmul.f32 %v349, %v393
  %v396 = vadd.f32 %v395, %v357
  %v398 = vrot.slane %v396, 6
  %v400 = vmul.f32 %v350, %v398
  %v401 = vadd.f32 %v400, %v358
  %v403 = vrot.slane %v401, 6
  %v405 = vmul.f32 %v350, %v403
  %v406 = vadd.f32 %v405, %v358
  %v408 = vrot.slane %v406, 6
  %v410 = vmul.f32 %v350, %v408
  %v411 = vadd.f32 %v410, %v358
  %v413 = vrot.slane %v411, 6
  %v415 = vmul.f32 %v350, %v413
  %v416 = vadd.f32 %v415, %v358
  %v418 = vrot.slane %v416, 6
  %v420 = vmul.f32 %v351, %v418
  %v421 = vadd.f32 %v420, %v359
  %v423 = vrot.slane %v421, 6
  %v425 = vmul.f32 %v351, %v423
  %v426 = vadd.f32 %v425, %v359
  %v428 = vrot.slane %v426, 6
  %v430 = vmul.f32 %v351, %v428
  %v431 = vadd.f32 %v430, %v359
  %v433 = vrot.slane %v431, 6
  %v435 = vmul.f32 %v351, %v433
  %v436 = vadd.f32 %v435, %v359
  %vm437 = vcmask 1041408
  %v438 = vsel %vm437, %v361, %v366
  %vm439 = vcmask 1043456
  %v440 = vsel %vm439, %v438, %v371
  %vm441 = vcmask 1045504
  %v442 = vsel %vm441, %v440, %v376
  %v443 = vsel %vm437, %v381, %v386
  %v444 = vsel %vm439, %v443, %v391
  %v445 = vsel %vm441, %v444, %v396
  %v446 = vsel %vm437, %v401, %v406
  %v447 = vsel %vm439, %v446, %v411
  %v448 = vsel %vm441, %v447, %v416
  %v449 = vsel %vm437, %v421, %v426
  %v450 = vsel %vm439, %v449, %v431
  %v451 = vsel %vm441, %v450, %v436
  %v452 = vxor.u32 %v177, 2147483648
  %v453 = vxor.u32 %v183, 2147483648
  %v454 = vxor.u32 %v189, 2147483648
  %v455 = vxor.u32 %v195, 2147483648
  %v456 = vmul.f32 %v452, 1.442695
  %v457 = vpow.pop %v456
  %v458 = vmul.f32 %v453, 1.442695
  %v459 = vpow.pop %v458
  %v460 = vmul.f32 %v454, 1.442695
  %v461 = vpow.pop %v460
  %v462 = vmul.f32 %v455, 1.442695
  %v463 = vpow.pop %v462
  %v464 = vadd.f32 %v457, 1.0
  %v465 = vadd.f32 %v459, 1.0
  %v466 = vadd.f32 %v461, 1.0
  %v467 = vadd.f32 %v463, 1.0
  %v468 = vrcp.pop %v464
  %v469 = vmul.f32 1.0, %v468
  %v470 = vrcp.pop %v465
  %v471 = vmul.f32 1.0, %v470
  %v472 = vrcp.pop %v466
  %v473 = vmul.f32 1.0, %v472
  %v474 = vrcp.pop %v467
  %v475 = vmul.f32 1.0, %v474
  %v476 = vmul.f32 %v177, %v469
  %v477 = vmul.f32 %v183, %v471
  %v478 = vmul.f32 %v189, %v473
  %v479 = vmul.f32 %v195, %v475
  %v480 = vmul.f32 %v442, %v476
  %v481 = vmul.f32 %v445, %v477
  %v482 = vmul.f32 %v448, %v478
  %v483 = vmul.f32 %v451, %v479
  %v484 = vld [vmem:[%s3] sm:$0xff]
  %v485 = vld [vmem:[%s3 + $0x8] sm:$0xff]
  %v486 = vld [vmem:[%s3 + $0x10] sm:$0xff]
  %v487 = vld [vmem:[%s3 + $0x18] sm:$0xff]
  %v488 = vld [vmem:[%s3 + $0x20] sm:$0xff]
  %v489 = vld [vmem:[%s3 + $0x28] sm:$0xff]
  %v490 = vld [vmem:[%s3 + $0x30] sm:$0xff]
  %v491 = vld [vmem:[%s3 + $0x38] sm:$0xff]
  %v492 = vld [vmem:[%s3 + $0x40] sm:$0xff]
  %v493 = vld [vmem:[%s3 + $0x48] sm:$0xff]
  %v494 = vld [vmem:[%s3 + $0x50] sm:$0xff]
  %v495 = vld [vmem:[%s3 + $0x58] sm:$0xff]
  %v496 = vld [vmem:[%s3 + $0x60] sm:$0xff]
  %v497 = vld [vmem:[%s3 + $0x68] sm:$0xff]
  %v498 = vld [vmem:[%s3 + $0x70] sm:$0xff]
  %v499 = vld [vmem:[%s3 + $0x78] sm:$0xff]
  %500 = vmatprep.subr.mxu0 0.0
  %501 = vmatpush1.msra.mxu0 %v484
  %502 = vmatprep.subr.mxu0 0.0
  %503 = vmatpush1.msra.mxu0 %v485
  %504 = vmatprep.subr.mxu0 0.0
  %505 = vmatpush1.msra.mxu0 %v486
  %506 = vmatprep.subr.mxu0 0.0
  %507 = vmatpush1.msra.mxu0 %v487
  %508 = vmatprep.subr.mxu0 0.0
  %509 = vmatpush1.msra.mxu0 %v488
  %510 = vmatprep.subr.mxu0 0.0
  %511 = vmatpush1.msra.mxu0 %v489
  %512 = vmatprep.subr.mxu0 0.0
  %513 = vmatpush1.msra.mxu0 %v490
  %514 = vmatprep.subr.mxu0 0.0
  %515 = vmatpush1.msra.mxu0 %v491
  %516 = vmatprep.subr.mxu0 0.0
  %517 = vmatpush1.msra.mxu0 %v492
  %518 = vmatprep.subr.mxu0 0.0
  %519 = vmatpush1.msra.mxu0 %v493
  %520 = vmatprep.subr.mxu0 0.0
  %521 = vmatpush1.msra.mxu0 %v494
  %522 = vmatprep.subr.mxu0 0.0
  %523 = vmatpush1.msra.mxu0 %v495
  %524 = vmatprep.subr.mxu0 0.0
  %525 = vmatpush1.msra.mxu0 %v496
  %526 = vmatprep.subr.mxu0 0.0
  %527 = vmatpush1.msra.mxu0 %v497
  %528 = vmatprep.subr.mxu0 0.0
  %529 = vmatpush1.msra.mxu0 %v498
  %530 = vmatprep.subr.mxu0 0.0
  %531 = vmatpush1.msra.mxu0 %v499
  %532 = vmatprep.subr.mxu0 0.0
  %533 = vmatpush1.msra.mxu0 0.0
  %534 = vmatprep.subr.mxu0 0.0
  %535 = vmatpush1.msra.mxu0 0.0
  %536 = vmatprep.subr.mxu0 0.0
  %537 = vmatpush1.msra.mxu0 0.0
  %538 = vmatprep.subr.mxu0 0.0
  %539 = vmatpush1.msra.mxu0 0.0
  %540 = vmatprep.subr.mxu0 0.0
  %541 = vmatpush1.msra.mxu0 0.0
  %542 = vmatprep.subr.mxu0 0.0
  %543 = vmatpush1.msra.mxu0 0.0
  %544 = vmatprep.subr.mxu0 0.0
  %545 = vmatpush1.msra.mxu0 0.0
  %546 = vmatprep.subr.mxu0 0.0
  %547 = vmatpush1.msra.mxu0 0.0
  %548 = vmatprep.subr.mxu0 0.0
  %549 = vmatpush1.msra.mxu0 0.0
  %550 = vmatprep.subr.mxu0 0.0
  %551 = vmatpush1.msra.mxu0 0.0
  %552 = vmatprep.subr.mxu0 0.0
  %553 = vmatpush1.msra.mxu0 0.0
  %554 = vmatprep.subr.mxu0 0.0
  %555 = vmatpush1.msra.mxu0 0.0
  %556 = vmatprep.subr.mxu0 0.0
  %557 = vmatpush1.msra.mxu0 0.0
  %558 = vmatprep.subr.mxu0 0.0
  %559 = vmatpush1.msra.mxu0 0.0
  %560 = vmatprep.subr.mxu0 0.0
  %561 = vmatpush1.msra.mxu0 0.0
  %562 = vmatprep.subr.mxu0 0.0
  %563 = vmatpush1.msra.mxu0 0.0
  %564 = vmatprep.mubr.f32.mxu0 0.0
  %565 = vmatmul.mubr.f32.gmra.mrb[0].mxu0 %v480
  %v566 = vpop.f32.mrb[0].mxu0
  %v567 = vadd.f32 0.0, %v566
  %v568 = vpop.f32.mrb[0].mxu0
  %569 = vmatprep.mubr.f32.mxu0 0.0
  %570 = vmatmul.mubr.f32.gmra.mrb[0].mxu0 %v481
  %v571 = vpop.f32.mrb[0].mxu0
  %v572 = vadd.f32 0.0, %v571
  %v573 = vpop.f32.mrb[0].mxu0
  %574 = vmatprep.mubr.f32.mxu0 0.0
  %575 = vmatmul.mubr.f32.gmra.mrb[0].mxu0 %v482
  %v576 = vpop.f32.mrb[0].mxu0
  %v577 = vadd.f32 0.0, %v576
  %v578 = vpop.f32.mrb[0].mxu0
  %579 = vmatprep.mubr.f32.mxu0 0.0
  %580 = vmatmul.mubr.f32.gmra.mrb[0].mxu0 %v483
  %v581 = vpop.f32.mrb[0].mxu0
  %v582 = vadd.f32 0.0, %v581
  %v583 = vpop.f32.mrb[0].mxu0
  %584 = vdwg.mxu0
  %v585 = vadd.f32 %v17, %v567
  %v586 = vadd.f32 %v18, %v572
  %v587 = vadd.f32 %v19, %v577
  %v588 = vadd.f32 %v20, %v582
  %589 = vst.msk [vmem:[%s4] sm:$0xff] %vm25, %v585
  %590 = vst.msk [vmem:[%s4 + $0x8] sm:$0xff] %vm25, %v586
  %591 = vst.msk [vmem:[%s4 + $0x10] sm:$0xff] %vm25, %v587
  %592 = vst.msk [vmem:[%s4 + $0x18] sm:$0xff] %vm25, %v588
  // Predicated region
  $region18: #{lstm_block.1} parent=0 // pred_check
    _
  $region19: #{lstm_block.1} parent=0 // pred_check_branch
    %594 = sbr.rel (0) target = $region21
  $region20: #{lstm_block.1} parent=0 // pred_region
    _
  $region21: #{lstm_block.1} parent=0 // pred_fallthru
    _
  // Predicated region
  $region22: #{lstm_block.1} parent=0 // pred_check
    _
  $region23: #{lstm_block.1} parent=0 // pred_check_branch
    %596 = sbr.rel (0) target = $region25
  $region24: #{lstm_block.1} parent=0 // pred_region
    _
  $region25: #{lstm_block.1} parent=0 // pred_fallthru
    _

</llo_original>
